<compile_context>
chip_gen: v7x
topology: tpu7x:2x2x1
jax: 0.10.0
libtpu: 0.0.40
codegen_flags: <defaults>
</compile_context>

<pallas_src>
import numpy as np
import jax
import jax.numpy as jnp
from jax.experimental import pallas as pl
from jax.experimental.pallas import tpu as pltpu

MIN_NORM = 1e-15
BALL_EPS_F32 = 0.004  # BALL_EPS[torch.float32]
_HI = jax.lax.Precision.HIGHEST

_VMEM_SOFT_CAP = 40 * 2**20   # shrink tiles if the pipelined footprint exceeds this


# ----------------------------------------------------------------------------
# Hyperbolic helpers (pure jnp; used by the wrapper prep and the reference).
# ----------------------------------------------------------------------------
def _tanh(x):
    return jnp.tanh(jnp.clip(x, -15.0, 15.0))


def _project(x, c):
    norm = jnp.maximum(jnp.sqrt(jnp.sum(x * x, axis=-1, keepdims=True)), MIN_NORM)
    maxnorm = (1.0 - BALL_EPS_F32) / jnp.sqrt(c)
    return jnp.where(norm > maxnorm, x / norm * maxnorm, x)


def _expmap0(u, c):
    sqrt_c = jnp.sqrt(c)
    u_norm = jnp.maximum(jnp.sqrt(jnp.sum(u * u, axis=-1, keepdims=True)), MIN_NORM)
    gamma_1 = _tanh(sqrt_c * u_norm) * u / (sqrt_c * u_norm)
    return _project(gamma_1, c)


def _mobius_add(x, y, c):
    x2 = jnp.sum(x * x, axis=-1, keepdims=True)
    y2 = jnp.sum(y * y, axis=-1, keepdims=True)
    xy = jnp.sum(x * y, axis=-1, keepdims=True)
    num = (1.0 + 2.0 * c * xy + c * y2) * x + (1.0 - c * x2) * y
    denom = 1.0 + 2.0 * c * xy + c * c * x2 * y2
    return num / jnp.maximum(denom, MIN_NORM)


def _givens_rotations(r, x):
    g = r.reshape(r.shape[0], -1, 2)
    g = g / jnp.maximum(jnp.linalg.norm(g, axis=-1, keepdims=True), MIN_NORM)
    xr = x.reshape(r.shape[0], -1, 2)
    x_rot = g[:, :, 0:1] * xr + g[:, :, 1:] * jnp.concatenate(
        [-xr[:, :, 1:], xr[:, :, 0:1]], axis=-1)
    return x_rot.reshape(r.shape[0], -1)


def _linear(x, w, b):          # torch nn.Linear: x @ W.T + b
    return jnp.dot(x, w.T, precision=_HI) + b


# ----------------------------------------------------------------------------
# Pallas kernel: one (batch-tile, entity-tile) block.  Entity axis is the OUTER
# grid dimension, so entity blocks stay resident while batch tiles stream.
# ----------------------------------------------------------------------------
def choice_score_kernel(
    need_ref,                    # SMEM (2*nbt,) int32: [fused-needed, hyp-needed] per batch tile
    qf_ref,                      # (TB, 2D)  gate-masked fused complex|euclidean query
    res2_ref,                    # (TB, R)   hyperbolic per-triplet point
    meta_ref,                    # (TB, 8)   [x2, c, sqrt_c, 1/sqrt_c, -4*g_hyp/c, 0, 0, 0]
    ent_f_ref,                   # (2D, TE)  fused entity table, pre-transposed
    ent_h_ref,                   # (R, TE)   unit-norm hyper entity table, pre-transposed
    vnorm_ref,                   # (1, TE)   entity hyper norms
    out_ref):                    # (TB, TE)
    f32 = jnp.float32
    i = pl.program_id(1)                       # batch-tile index (inner grid axis)
    need_fused = need_ref[2 * i] != 0
    need_hyp = need_ref[2 * i + 1] != 0

    # Tile touched by neither expert (only possible for all-padding tiles).
    @pl.when(jnp.logical_not(jnp.logical_or(need_fused, need_hyp)))
    def _zero():
        out_ref[...] = jnp.zeros_like(out_ref)

    # ---- complex + Euclidean experts, fused into one K=2D matmul ------------
    # (one-hot gate already folded into the query rows -> direct assignment)
    @pl.when(need_fused)
    def _fused():
        out_ref[...] = jnp.dot(qf_ref[...], ent_f_ref[...],
                               preferred_element_type=f32)

    # ---- hyperbolic expert (hyp_distance_multi_c only; prep hoisted) --------
    @pl.when(need_hyp)
    def _hyperbolic():
        meta = meta_ref[...]
        x2 = meta[:, 0:1]                      # ||res2||^2
        c = meta[:, 1:2]                       # softplus(c[rel])
        sqrt_c = meta[:, 2:3]
        inv_sqrt_c = meta[:, 3:4]
        scale = meta[:, 4:5]                   # -4 * gate_hyp / c
        vnorm = vnorm_ref[...]                 # (1, TE)

        # xv = res2 . v / ||v||   (1/||v|| folded into ent_h table columns)
        xv = jnp.dot(res2_ref[...], ent_h_ref[...], preferred_element_type=f32)
        gamma = _tanh(sqrt_c * vnorm) * inv_sqrt_c       # (TB, TE)
        cg = c * gamma
        u = 1.0 - 2.0 * cg * xv
        c1 = u + cg * gamma
        c2 = 1.0 - c * x2                                # (TB, 1)
        num_sq = (c1 * c1 * x2 + (c2 * c2) * (gamma * gamma)
                  - 2.0 * (c1 * c2) * (gamma * xv))
        num = jnp.sqrt(jnp.maximum(num_sq, 0.0))
        denom = u + cg * cg * x2
        pw = num * pl.reciprocal(jnp.maximum(denom, MIN_NORM), approx=True)
        # TODO(synk): torch's Artanh upcasts to float64; computed in float32 here
        # (TPU vector units have no f64).
        z = jnp.clip(sqrt_c * pw, -1.0 + 1e-5, 1.0 - 1e-5)
        # exact divide in the artanh (tightest numerical margin near |z| -> 1)
        at = 0.5 * jnp.log((1.0 + z) / (1.0 - z))
        s_hyp = scale * (at * at)              # = -(2*artanh(z)/sqrt_c)^2 * gate_hyp

        @pl.when(need_fused)
        def _acc():
            out_ref[...] = out_ref[...] + s_hyp

        @pl.when(jnp.logical_not(need_fused))
        def _set():
            out_ref[...] = s_hyp


# ----------------------------------------------------------------------------
# Host-side glue.
# ----------------------------------------------------------------------------
def _round_up(x, m):
    return ((x + m - 1) // m) * m


def _pad_rows(x, n_rows, value=0.0):
    pad = n_rows - x.shape[0]
    if pad == 0:
        return x
    return jnp.pad(x, ((0, pad), (0, 0)), constant_values=value)


def _pad_cols(x, n_cols, value=0.0):
    pad = n_cols - x.shape[1]
    if pad == 0:
        return x
    return jnp.pad(x, ((0, 0), (0, pad)), constant_values=value)


def _tile_bytes(rows, cols, itemsize=4):
    return _round_up(rows, 8) * _round_up(cols, 128) * itemsize


def _vmem_footprint(tb, te, D, R):
    """Double-buffered per-step VMEM use of the kernel (f32 everywhere)."""
    per_step = (_tile_bytes(tb, 2 * D) + _tile_bytes(tb, R) + _tile_bytes(tb, 8)
                + _tile_bytes(2 * D, te) + _tile_bytes(R, te) + _tile_bytes(1, te)
                + _tile_bytes(tb, te))
    return 2 * per_step


def gumbel_gate(params, ent_embs, rel_embs, triplets, key):
    t0, t1 = triplets[:, 0], triplets[:, 1]
    combine = jnp.concatenate([ent_embs[t0], rel_embs[t1]], axis=1)
    logits = _linear(combine, params['gate_w'], params['gate_b'])
    gumbel = jax.random.gumbel(key, logits.shape, dtype=jnp.float32)
    y_soft = jax.nn.softmax((logits + gumbel) / 1.0, axis=-1)
    gate_probs = jax.nn.one_hot(jnp.argmax(y_soft, axis=-1), 3,
                                dtype=jnp.float32)   # hard=True forward value
    # TODO(synk): torch hard=True uses a straight-through estimator; forward-only here.
    importance = gate_probs.sum(axis=0)
    mean_imp = importance.mean()
    std_imp = jnp.std(importance, ddof=1)            # torch.std (unbiased)
    aux_loss = jnp.where(mean_imp != 0, (std_imp / mean_imp) ** 2, 0.0)
    return gate_probs, aux_loss


def _expert_prep(params, ent_embs, rel_embs, triplets):
    """Entity tables + all per-triplet-only work (hoisted out of the kernel)."""
    D = ent_embs.shape[-1]
    R = D // 2
    t0, t1 = triplets[:, 0], triplets[:, 1]

    ent_c_tab = _linear(ent_embs, params['ent_to_complex_w'], params['ent_to_complex_b'])
    rel_c_tab = _linear(rel_embs, params['rel_to_complex_w'], params['rel_to_complex_b'])
    ent_e_tab = _linear(ent_embs, params['ent_to_real_w'], params['ent_to_real_b'])
    rel_e_tab = _linear(rel_embs, params['rel_to_real_w'], params['rel_to_real_b'])
    ent_h_tab = _linear(0.01 * ent_embs, params['ent_to_hyper_w'], params['ent_to_hyper_b'])
    rel_h_tab = _linear(0.01 * rel_embs, params['rel_to_hyper_w'], params['rel_to_hyper_b'])

    # complex query
    lhs_c, rel_c = ent_c_tab[t0], rel_c_tab[t1]
    l0, l1 = lhs_c[:, :R], lhs_c[:, R:]
    r0, r1 = rel_c[:, :R], rel_c[:, R:]
    q_complex = jnp.concatenate([l0 * r0 - l1 * r1, l0 * r1 + l1 * r0], axis=1)

    # euclidean query
    q_euc = ent_e_tab[t0] * rel_e_tab[t1]

    # hyperbolic per-triplet prep -> res2, ||res2||^2, curvature
    lhs_h, rel_h = ent_h_tab[t0], rel_h_tab[t1]
    c_trip = jax.nn.softplus(params['c'][t1]).astype(jnp.float32)   # (B, 1)
    head = _expmap0(lhs_h, c_trip)
    rel1 = _expmap0(rel_h[:, :R], c_trip)
    rel2 = _expmap0(rel_h[:, R:], c_trip)
    x = _project(_mobius_add(head, rel1, c_trip), c_trip)
    res1 = _givens_rotations(params['rel_diag'][t1], x)
    res2 = _mobius_add(res1, rel2, c_trip)
    x2 = jnp.sum(res2 * res2, axis=-1, keepdims=True)

    ent_h_norm = jnp.sqrt(jnp.sum(ent_h_tab * ent_h_tab, axis=-1))   # (N,)

    return (q_complex, q_euc, res2, x2, c_trip,
            ent_c_tab, ent_e_tab, ent_h_tab, ent_h_norm)


def choice_score(params, ent_embs, rel_embs, triplets, gumbel_key,
                 tb=128, te=1024):
    """ChoicE.score -> Geometric_Chooser.forward.  Returns (scores, aux_loss)."""
    D = ent_embs.shape[-1]
    R = D // 2
    n_ent = ent_embs.shape[0]
    B = triplets.shape[0]
    f32 = jnp.float32

    gate_probs, aux_loss = gumbel_gate(params, ent_embs, rel_embs, triplets, gumbel_key)
    (q_complex, q_euc, res2, x2, c_trip,
     ent_c_tab, ent_e_tab, ent_h_tab, ent_h_norm) = _expert_prep(
         params, ent_embs, rel_embs, triplets)

    # ---- MoE grouping: sort rows by hard-selected expert --------------------
    expert_id = jnp.argmax(gate_probs, axis=-1)
    order = jnp.argsort(expert_id)          # stable
    inv_order = jnp.argsort(order)

    # ---- tile sizes ----------------------------------------------------------
    tb = min(tb, _round_up(B, 8))
    te = min(te, _round_up(n_ent, 128))
    B_pad = _round_up(B, tb)
    N_pad = _round_up(n_ent, te)
    # v7x: make sure the grid has >= 2 blocks so both TensorCores get work
    if (B_pad // tb) * (N_pad // te) < 2 and N_pad >= 256:
        te = max(128, _round_up(N_pad // 2, 128))
        N_pad = _round_up(n_ent, te)
    # keep the double-buffered footprint under the soft VMEM cap
    while _vmem_footprint(tb, te, D, R) > _VMEM_SOFT_CAP and te > 128:
        new_te = max(128, _round_up(te // 2, 128))
        if new_te == te:
            break
        te = new_te
        N_pad = _round_up(n_ent, te)
    nbt = B_pad // tb

    # ---- per-row inputs (gate folded in), sorted by expert, padded ----------
    g0 = gate_probs[:, 0:1]
    g1 = gate_probs[:, 1:2]
    g2 = gate_probs[:, 2:3]
    q_fused = jnp.concatenate([q_complex * g0, q_euc * g1], axis=1)   # (B, 2D)

    def prep_q(arr, pad_value=0.0):
        return _pad_rows(arr[order], B_pad, pad_value)

    qf_p = prep_q(q_fused)
    res2_p = prep_q(res2)
    x2_p = prep_q(x2)
    c_p = prep_q(c_trip, 1.0)               # pad curvature with 1.0 (finite math)
    g2_p = prep_q(g2)
    gate_p = prep_q(gate_probs)
    sqrt_c_p = jnp.sqrt(c_p)
    meta_p = jnp.concatenate(
        [x2_p, c_p, sqrt_c_p, 1.0 / sqrt_c_p, -4.0 * g2_p / c_p,
         jnp.zeros((B_pad, 3), f32)], axis=1).astype(f32)             # (B_pad, 8)

    # ---- entity tables, pre-transposed to (K, N_pad) (lane-dense) -----------
    ent_fused_T = jnp.concatenate([ent_c_tab, ent_e_tab], axis=1).T   # (2D, N)
    vnorm = ent_h_norm                                                # (N,)
    ent_h_unit_T = (ent_h_tab / jnp.maximum(vnorm, MIN_NORM)[:, None]).T   # (R, N)

    ent_f_p = _pad_cols(ent_fused_T, N_pad).astype(f32)
    ent_h_p = _pad_cols(ent_h_unit_T, N_pad).astype(f32)
    vnorm_p = jnp.pad(vnorm, (0, N_pad - n_ent))[None, :].astype(f32)      # (1, N_pad)

    # ---- flattened per-batch-tile expert-need mask (SMEM scalar prefetch) ---
    gtile = gate_p.reshape(nbt, tb, 3).sum(axis=1)                    # (nbt, 3)
    need_fused = (gtile[:, 0] + gtile[:, 1]) > 0.0
    need_hyp = gtile[:, 2] > 0.0
    need = jnp.stack([need_fused, need_hyp], axis=1).astype(jnp.int32).reshape(-1)

    # ---- grid: entity tiles OUTER (stream once), batch tiles inner ----------
    grid = (N_pad // te, nbt)
    q_map = lambda j, i, need: (i, 0)
    e_map = lambda j, i, need: (0, j)
    o_map = lambda j, i, need: (i, j)

    grid_spec = pltpu.PrefetchScalarGridSpec(
        num_scalar_prefetch=1, grid=grid,
        in_specs=[
            pl.BlockSpec((tb, 2 * D), q_map),      # fused gated query
            pl.BlockSpec((tb, R), q_map),          # res2
            pl.BlockSpec((tb, 8), q_map),          # packed per-row scalars
            pl.BlockSpec((2 * D, te), e_map),      # fused entity table (K, N)
            pl.BlockSpec((R, te), e_map),          # unit hyper entity table (K, N)
            pl.BlockSpec((1, te), e_map),          # entity hyper norms
        ],
        out_specs=pl.BlockSpec((tb, te), o_map),
    )

    footprint = _vmem_footprint(tb, te, D, R)
    vmem_limit = int(min(max(4 * footprint, 32 * 2**20), 48 * 2**20))

    scores_padded = pl.pallas_call(
        choice_score_kernel,
        out_shape=jax.ShapeDtypeStruct((B_pad, N_pad), f32),
        grid_spec=grid_spec,
        compiler_params=pltpu.CompilerParams(
            dimension_semantics=("parallel", "parallel"),
            vmem_limit_bytes=vmem_limit),
    )(need, qf_p, res2_p, meta_p, ent_f_p, ent_h_p, vnorm_p)

    # un-group rows and drop padding
    scores = scores_padded[inv_order, :n_ent]
    return scores, aux_loss


# ----------------------------------------------------------------------------
# Pure-JAX reference for correctness checking.
# ----------------------------------------------------------------------------
def reference_scores(params, ent_embs, rel_embs, triplets, gate_probs):
    hi = _HI
    D = ent_embs.shape[-1]
    R = D // 2
    t0, t1 = triplets[:, 0], triplets[:, 1]

    # complex
    ec = _linear(ent_embs, params['ent_to_complex_w'], params['ent_to_complex_b'])
    rc = _linear(rel_embs, params['rel_to_complex_w'], params['rel_to_complex_b'])
    lhs, rel = ec[t0], rc[t1]
    q = jnp.concatenate([lhs[:, :R] * rel[:, :R] - lhs[:, R:] * rel[:, R:],
                         lhs[:, :R] * rel[:, R:] + lhs[:, R:] * rel[:, :R]], axis=1)
    s_c = jnp.dot(q, ec.T, precision=hi)

    # euclidean
    ee = _linear(ent_embs, params['ent_to_real_w'], params['ent_to_real_b'])
    re = _linear(rel_embs, params['rel_to_real_w'], params['rel_to_real_b'])
    s_e = jnp.dot(ee[t0] * re[t1], ee.T, precision=hi)

    # hyperbolic
    eh = _linear(0.01 * ent_embs, params['ent_to_hyper_w'], params['ent_to_hyper_b'])
    rh = _linear(0.01 * rel_embs, params['rel_to_hyper_w'], params['rel_to_hyper_b'])
    lhs_h, rel_h = eh[t0], rh[t1]
    c = jax.nn.softplus(params['c'][t1])
    sqrt_c = jnp.sqrt(c)
    head = _expmap0(lhs_h, c)
    rel1 = _expmap0(rel_h[:, :R], c)
    rel2 = _expmap0(rel_h[:, R:], c)
    x = _project(_mobius_add(head, rel1, c), c)
    res1 = _givens_rotations(params['rel_diag'][t1], x)
    res2 = _mobius_add(res1, rel2, c)
    vnorm = jnp.linalg.norm(eh, axis=-1, keepdims=True).T
    xv = jnp.dot(res2, eh.T, precision=hi) / vnorm
    gamma = _tanh(sqrt_c * vnorm) / sqrt_c
    x2 = jnp.sum(res2 * res2, axis=-1, keepdims=True)
    c1 = 1.0 - 2.0 * c * gamma * xv + c * gamma ** 2
    c2 = 1.0 - c * x2
    num = jnp.sqrt(c1 ** 2 * x2 + c2 ** 2 * gamma ** 2 - 2.0 * c1 * c2 * gamma * xv)
    denom = 1.0 - 2.0 * c * gamma * xv + c ** 2 * gamma ** 2 * x2
    pw = num / jnp.maximum(denom, MIN_NORM)
    z = jnp.clip(sqrt_c * pw, -1.0 + 1e-5, 1.0 - 1e-5)
    dist = 2.0 * (0.5 * (jnp.log(1.0 + z) - jnp.log(1.0 - z))) / sqrt_c
    s_h = -(dist ** 2)

    experts = jnp.stack([s_c, s_e, s_h], axis=1)           # (B, 3, N_e)
    return jnp.einsum('be,ben->bn', gate_probs, experts)   # bmm + squeeze


# ----------------------------------------------------------------------------
# Deterministic parameter initialization (shapes from Geometric_Chooser.__init__).
# ----------------------------------------------------------------------------
def init_params(key, num_rel, dim_str):
    R = dim_str // 2
    ks = jax.random.split(key, 15)

    def linear_init(kw, kb, out_dim, in_dim):
        bound = 1.0 / np.sqrt(in_dim)
        w = jax.random.uniform(kw, (out_dim, in_dim), jnp.float32, -bound, bound)
        b = jax.random.uniform(kb, (out_dim,), jnp.float32, -bound, bound)
        return w, b

    p = {}
    p['gate_w'], p['gate_b'] = linear_init(ks[0], ks[1], 3, 2 * dim_str)
    p['ent_to_complex_w'], p['ent_to_complex_b'] = linear_init(ks[2], ks[3], dim_str, dim_str)
    p['rel_to_complex_w'], p['rel_to_complex_b'] = linear_init(ks[4], ks[5], dim_str, dim_str)
    p['ent_to_real_w'], p['ent_to_real_b'] = linear_init(ks[6], ks[7], dim_str, dim_str)
    p['rel_to_real_w'], p['rel_to_real_b'] = linear_init(ks[8], ks[9], dim_str, dim_str)
    p['ent_to_hyper_w'], p['ent_to_hyper_b'] = linear_init(ks[10], ks[11], R, dim_str)
    p['rel_to_hyper_w'], p['rel_to_hyper_b'] = linear_init(ks[12], ks[13], dim_str, dim_str)
    p['rel_diag'] = 2.0 * jax.random.uniform(ks[14], (num_rel, R), jnp.float32) - 1.0
    p['c'] = jnp.ones((num_rel, 1), jnp.float32)
    return p


if __name__ == "__main__":
    NUM_ENT, NUM_REL, DIM_STR, BATCH = 256, 16, 32, 16

    key = jax.random.PRNGKey(0)
    k_param, k_ent, k_rel, k_h, k_r, k_t, k_gumbel = jax.random.split(key, 7)

    params = init_params(k_param, NUM_REL, DIM_STR)
    # ent/rel embeddings stand in for the (undefined) multimodal transformer outputs.
    ent_embs = jax.random.normal(k_ent, (NUM_ENT, DIM_STR), jnp.float32)
    rel_embs = jax.random.normal(k_rel, (NUM_REL, DIM_STR), jnp.float32)
    triplets = jnp.stack([
        jax.random.randint(k_h, (BATCH,), 0, NUM_ENT),
        jax.random.randint(k_r, (BATCH,), 0, NUM_REL),
        jax.random.randint(k_t, (BATCH,), 0, NUM_ENT),
    ], axis=1)

    scores, aux_loss = choice_score(params, ent_embs, rel_embs, triplets, k_gumbel)
    scores = jax.block_until_ready(scores)
    aux_loss = jax.block_until_ready(aux_loss)

    # correctness check vs. pure-JAX reference (same deterministic gumbel gate)
    gate_probs, _ = gumbel_gate(params, ent_embs, rel_embs, triplets, k_gumbel)
    ref = reference_scores(params, ent_embs, rel_embs, triplets, gate_probs)
    np.testing.assert_allclose(np.asarray(scores), np.asarray(ref),
                               rtol=2e-2, atol=2e-3)
    print("KERNEL_OK")
</pallas_src>

<mosaic_0001>
module attributes {stable_mosaic.version = 11 : i64} {
  func.func @choice_score_kernel(%arg0: i32, %arg1: i32, %arg2: memref<2xi32, #tpu.memory_space<smem>>, %arg3: memref<16x64xf32, #tpu.memory_space<vmem>>, %arg4: memref<16x16xf32, #tpu.memory_space<vmem>>, %arg5: memref<16x8xf32, #tpu.memory_space<vmem>>, %arg6: memref<64x128xf32, #tpu.memory_space<vmem>>, %arg7: memref<16x128xf32, #tpu.memory_space<vmem>>, %arg8: memref<1x128xf32, #tpu.memory_space<vmem>>, %arg9: memref<16x128xf32, #tpu.memory_space<vmem>>) attributes {dimension_semantics = [#tpu.dimension_semantics<parallel>, #tpu.dimension_semantics<parallel>], iteration_bounds = array<i64: 2, 1>, scalar_prefetch = 1 : i64, scratch_operands = 0 : i64, tpu.core_type = #tpu.core_type<tc>, window_params = [{transform_indices = @transform_0, window_bounds = array<i64: 16, 64>}, {transform_indices = @transform_1, window_bounds = array<i64: 16, 16>}, {transform_indices = @transform_2, window_bounds = array<i64: 16, 8>}, {transform_indices = @transform_3, window_bounds = array<i64: 64, 128>}, {transform_indices = @transform_4, window_bounds = array<i64: 16, 128>}, {transform_indices = @transform_5, window_bounds = array<i64: 1, 128>}, {transform_indices = @transform_6, window_bounds = array<i64: 16, 128>}]} {
    %c2_i32 = arith.constant 2 : i32
    %0 = arith.muli %c2_i32, %arg1 : i32
    %1 = arith.index_cast %0 : i32 to index
    %2 = memref.load %arg2[%1] : memref<2xi32, #tpu.memory_space<smem>>
    %c0_i32 = arith.constant 0 : i32
    %3 = arith.cmpi ne, %2, %c0_i32 : i32
    %c2_i32_0 = arith.constant 2 : i32
    %4 = arith.muli %c2_i32_0, %arg1 : i32
    %c1_i32 = arith.constant 1 : i32
    %5 = arith.addi %4, %c1_i32 : i32
    %6 = arith.index_cast %5 : i32 to index
    %7 = memref.load %arg2[%6] : memref<2xi32, #tpu.memory_space<smem>>
    %c0_i32_1 = arith.constant 0 : i32
    %8 = arith.cmpi ne, %7, %c0_i32_1 : i32
    %9 = arith.ori %3, %8 : i1
    %true = arith.constant true
    %10 = arith.xori %9, %true : i1
    %11 = arith.extui %10 : i1 to i32
    %c0_i32_2 = arith.constant 0 : i32
    %12 = arith.cmpi ne, %11, %c0_i32_2 : i32
    scf.if %12 {
      %cst = arith.constant 0.000000e+00 : f32
      %17 = vector.broadcast %cst : f32 to vector<16x128xf32>
      %c0 = arith.constant 0 : index
      %c0_5 = arith.constant 0 : index
      %18 = vector.load %arg9[%c0, %c0_5] : memref<16x128xf32, #tpu.memory_space<vmem>>, vector<16x128xf32>
      tpu.vector_store %arg9[%c0, %c0_5], %17 {strides = array<i32>} : memref<16x128xf32, #tpu.memory_space<vmem>>, vector<16x128xf32>,
    } else {
    }
    %13 = arith.extui %3 : i1 to i32
    %c0_i32_3 = arith.constant 0 : i32
    %14 = arith.cmpi ne, %13, %c0_i32_3 : i32
    scf.if %14 {
      %c0 = arith.constant 0 : index
      %c0_5 = arith.constant 0 : index
      %17 = vector.load %arg3[%c0, %c0_5] : memref<16x64xf32, #tpu.memory_space<vmem>>, vector<16x64xf32>
      %c0_6 = arith.constant 0 : index
      %c0_7 = arith.constant 0 : index
      %18 = vector.load %arg6[%c0_6, %c0_7] : memref<64x128xf32, #tpu.memory_space<vmem>>, vector<64x128xf32>
      %cst = arith.constant dense<0.000000e+00> : vector<16x128xf32>
      %19 = tpu.matmul %17, %18, %cst {dimension_numbers = #tpu.dot_dimension_numbers<[1], [0], [0], [1], [0, 0, 1, 1], [], []>} : vector<16x64xf32>, vector<64x128xf32>, vector<16x128xf32> -> vector<16x128xf32>
      %c0_8 = arith.constant 0 : index
      %c0_9 = arith.constant 0 : index
      %20 = vector.load %arg9[%c0_8, %c0_9] : memref<16x128xf32, #tpu.memory_space<vmem>>, vector<16x128xf32>
      tpu.vector_store %arg9[%c0_8, %c0_9], %19 {strides = array<i32>} : memref<16x128xf32, #tpu.memory_space<vmem>>, vector<16x128xf32>,
    } else {
    }
    %15 = arith.extui %8 : i1 to i32
    %c0_i32_4 = arith.constant 0 : i32
    %16 = arith.cmpi ne, %15, %c0_i32_4 : i32
    scf.if %16 {
      %c0 = arith.constant 0 : index
      %c0_5 = arith.constant 0 : index
      %17 = vector.load %arg5[%c0, %c0_5] : memref<16x8xf32, #tpu.memory_space<vmem>>, vector<16x8xf32>
      %18 = vector.extract_strided_slice %17 {offsets = [0, 0], sizes = [16, 1], strides = [1, 1]} : vector<16x8xf32> to vector<16x1xf32>
      %19 = vector.extract_strided_slice %17 {offsets = [0, 1], sizes = [16, 1], strides = [1, 1]} : vector<16x8xf32> to vector<16x1xf32>
      %20 = vector.extract_strided_slice %17 {offsets = [0, 2], sizes = [16, 1], strides = [1, 1]} : vector<16x8xf32> to vector<16x1xf32>
      %21 = vector.extract_strided_slice %17 {offsets = [0, 3], sizes = [16, 1], strides = [1, 1]} : vector<16x8xf32> to vector<16x1xf32>
      %22 = vector.extract_strided_slice %17 {offsets = [0, 4], sizes = [16, 1], strides = [1, 1]} : vector<16x8xf32> to vector<16x1xf32>
      %c0_6 = arith.constant 0 : index
      %c0_7 = arith.constant 0 : index
      %23 = vector.load %arg8[%c0_6, %c0_7] : memref<1x128xf32, #tpu.memory_space<vmem>>, vector<1x128xf32>
      %c0_8 = arith.constant 0 : index
      %c0_9 = arith.constant 0 : index
      %24 = vector.load %arg4[%c0_8, %c0_9] : memref<16x16xf32, #tpu.memory_space<vmem>>, vector<16x16xf32>
      %c0_10 = arith.constant 0 : index
      %c0_11 = arith.constant 0 : index
      %25 = vector.load %arg7[%c0_10, %c0_11] : memref<16x128xf32, #tpu.memory_space<vmem>>, vector<16x128xf32>
      %cst = arith.constant dense<0.000000e+00> : vector<16x128xf32>
      %26 = tpu.matmul %24, %25, %cst {dimension_numbers = #tpu.dot_dimension_numbers<[1], [0], [0], [1], [0, 0, 1, 1], [], []>} : vector<16x16xf32>, vector<16x128xf32>, vector<16x128xf32> -> vector<16x128xf32>
      %27 = vector.broadcast %20 : vector<16x1xf32> to vector<16x128xf32>
      %28 = vector.broadcast %23 : vector<1x128xf32> to vector<16x128xf32>
      %29 = arith.mulf %27, %28 : vector<16x128xf32>
      %cst_12 = arith.constant -1.500000e+01 : f32
      %cst_13 = arith.constant 1.500000e+01 : f32
      %30 = vector.broadcast %cst_12 : f32 to vector<16x128xf32>
      %31 = arith.maximumf %30, %29 : vector<16x128xf32>
      %32 = vector.broadcast %cst_13 : f32 to vector<16x128xf32>
      %33 = arith.minimumf %32, %31 : vector<16x128xf32>
      %34 = math.tanh %33 : vector<16x128xf32>
      %35 = vector.broadcast %21 : vector<16x1xf32> to vector<16x128xf32>
      %36 = arith.mulf %34, %35 : vector<16x128xf32>
      %37 = vector.broadcast %19 : vector<16x1xf32> to vector<16x128xf32>
      %38 = arith.mulf %37, %36 : vector<16x128xf32>
      %cst_14 = arith.constant 2.000000e+00 : f32
      %39 = vector.broadcast %cst_14 : f32 to vector<16x128xf32>
      %40 = arith.mulf %39, %38 : vector<16x128xf32>
      %41 = arith.mulf %40, %26 : vector<16x128xf32>
      %cst_15 = arith.constant 1.000000e+00 : f32
      %42 = vector.broadcast %cst_15 : f32 to vector<16x128xf32>
      %43 = arith.subf %42, %41 : vector<16x128xf32>
      %44 = arith.mulf %38, %36 : vector<16x128xf32>
      %45 = arith.addf %43, %44 : vector<16x128xf32>
      %46 = arith.mulf %19, %18 : vector<16x1xf32>
      %cst_16 = arith.constant 1.000000e+00 : f32
      %47 = vector.broadcast %cst_16 : f32 to vector<16x1xf32>
      %48 = arith.subf %47, %46 : vector<16x1xf32>
      %49 = arith.mulf %45, %45 : vector<16x128xf32>
      %50 = vector.broadcast %18 : vector<16x1xf32> to vector<16x128xf32>
      %51 = arith.mulf %49, %50 : vector<16x128xf32>
      %52 = arith.mulf %48, %48 : vector<16x1xf32>
      %53 = arith.mulf %36, %36 : vector<16x128xf32>
      %54 = vector.broadcast %52 : vector<16x1xf32> to vector<16x128xf32>
      %55 = arith.mulf %54, %53 : vector<16x128xf32>
      %56 = arith.addf %51, %55 : vector<16x128xf32>
      %57 = vector.broadcast %48 : vector<16x1xf32> to vector<16x128xf32>
      %58 = arith.mulf %45, %57 : vector<16x128xf32>
      %cst_17 = arith.constant 2.000000e+00 : f32
      %59 = vector.broadcast %cst_17 : f32 to vector<16x128xf32>
      %60 = arith.mulf %59, %58 : vector<16x128xf32>
      %61 = arith.mulf %36, %26 : vector<16x128xf32>
      %62 = arith.mulf %60, %61 : vector<16x128xf32>
      %63 = arith.subf %56, %62 : vector<16x128xf32>
      %cst_18 = arith.constant 0.000000e+00 : f32
      %64 = vector.broadcast %cst_18 : f32 to vector<16x128xf32>
      %65 = arith.maximumf %63, %64 : vector<16x128xf32>
      %66 = math.sqrt %65 : vector<16x128xf32>
      %67 = arith.mulf %38, %38 : vector<16x128xf32>
      %68 = vector.broadcast %18 : vector<16x1xf32> to vector<16x128xf32>
      %69 = arith.mulf %67, %68 : vector<16x128xf32>
      %70 = arith.addf %43, %69 : vector<16x128xf32>
      %cst_19 = arith.constant 1.000000e-15 : f32
      %71 = vector.broadcast %cst_19 : f32 to vector<16x128xf32>
      %72 = arith.maximumf %70, %71 : vector<16x128xf32>
      %73 = tpu.reciprocal %72 {approx = true} : vector<16x128xf32> -> vector<16x128xf32>
      %74 = arith.mulf %66, %73 : vector<16x128xf32>
      %75 = vector.broadcast %20 : vector<16x1xf32> to vector<16x128xf32>
      %76 = arith.mulf %75, %74 : vector<16x128xf32>
      %cst_20 = arith.constant -0.999989986 : f32
      %cst_21 = arith.constant 0.999989986 : f32
      %77 = vector.broadcast %cst_20 : f32 to vector<16x128xf32>
      %78 = arith.maximumf %77, %76 : vector<16x128xf32>
      %79 = vector.broadcast %cst_21 : f32 to vector<16x128xf32>
      %80 = arith.minimumf %79, %78 : vector<16x128xf32>
      %cst_22 = arith.constant 1.000000e+00 : f32
      %81 = vector.broadcast %cst_22 : f32 to vector<16x128xf32>
      %82 = arith.addf %81, %80 : vector<16x128xf32>
      %cst_23 = arith.constant 1.000000e+00 : f32
      %83 = vector.broadcast %cst_23 : f32 to vector<16x128xf32>
      %84 = arith.subf %83, %80 : vector<16x128xf32>
      %85 = arith.divf %82, %84 : vector<16x128xf32>
      %86 = math.log %85 : vector<16x128xf32>
      %cst_24 = arith.constant 5.000000e-01 : f32
      %87 = vector.broadcast %cst_24 : f32 to vector<16x128xf32>
      %88 = arith.mulf %87, %86 : vector<16x128xf32>
      %89 = arith.mulf %88, %88 : vector<16x128xf32>
      %90 = vector.broadcast %22 : vector<16x1xf32> to vector<16x128xf32>
      %91 = arith.mulf %90, %89 : vector<16x128xf32>
      %92 = arith.extui %3 : i1 to i32
      %c0_i32_25 = arith.constant 0 : i32
      %93 = arith.cmpi ne, %92, %c0_i32_25 : i32
      scf.if %93 {
        %c0_28 = arith.constant 0 : index
        %c0_29 = arith.constant 0 : index
        %97 = vector.load %arg9[%c0_28, %c0_29] : memref<16x128xf32, #tpu.memory_space<vmem>>, vector<16x128xf32>
        %98 = arith.addf %97, %91 : vector<16x128xf32>
        %c0_30 = arith.constant 0 : index
        %c0_31 = arith.constant 0 : index
        %99 = vector.load %arg9[%c0_30, %c0_31] : memref<16x128xf32, #tpu.memory_space<vmem>>, vector<16x128xf32>
        tpu.vector_store %arg9[%c0_30, %c0_31], %98 {strides = array<i32>} : memref<16x128xf32, #tpu.memory_space<vmem>>, vector<16x128xf32>,
      } else {
      }
      %true_26 = arith.constant true
      %94 = arith.xori %3, %true_26 : i1
      %95 = arith.extui %94 : i1 to i32
      %c0_i32_27 = arith.constant 0 : i32
      %96 = arith.cmpi ne, %95, %c0_i32_27 : i32
      scf.if %96 {
        %c0_28 = arith.constant 0 : index
        %c0_29 = arith.constant 0 : index
        %97 = vector.load %arg9[%c0_28, %c0_29] : memref<16x128xf32, #tpu.memory_space<vmem>>, vector<16x128xf32>
        tpu.vector_store %arg9[%c0_28, %c0_29], %91 {strides = array<i32>} : memref<16x128xf32, #tpu.memory_space<vmem>>, vector<16x128xf32>,
      } else {
      }
    } else {
    }
    return
  }
  func.func @transform_0(%arg0: i32, %arg1: i32, %arg2: memref<2xi32, #tpu.memory_space<smem>>) -> (i32, i32) {
    %c0_i32 = arith.constant 0 : i32
    %c0_i32_0 = arith.constant 0 : i32
    return %arg1, %c0_i32 : i32, i32
  }
  func.func @transform_1(%arg0: i32, %arg1: i32, %arg2: memref<2xi32, #tpu.memory_space<smem>>) -> (i32, i32) {
    %c0_i32 = arith.constant 0 : i32
    %c0_i32_0 = arith.constant 0 : i32
    return %arg1, %c0_i32 : i32, i32
  }
  func.func @transform_2(%arg0: i32, %arg1: i32, %arg2: memref<2xi32, #tpu.memory_space<smem>>) -> (i32, i32) {
    %c0_i32 = arith.constant 0 : i32
    %c0_i32_0 = arith.constant 0 : i32
    return %arg1, %c0_i32 : i32, i32
  }
  func.func @transform_3(%arg0: i32, %arg1: i32, %arg2: memref<2xi32, #tpu.memory_space<smem>>) -> (i32, i32) {
    %c0_i32 = arith.constant 0 : i32
    %c0_i32_0 = arith.constant 0 : i32
    return %c0_i32, %arg0 : i32, i32
  }
  func.func @transform_4(%arg0: i32, %arg1: i32, %arg2: memref<2xi32, #tpu.memory_space<smem>>) -> (i32, i32) {
    %c0_i32 = arith.constant 0 : i32
    %c0_i32_0 = arith.constant 0 : i32
    return %c0_i32, %arg0 : i32, i32
  }
  func.func @transform_5(%arg0: i32, %arg1: i32, %arg2: memref<2xi32, #tpu.memory_space<smem>>) -> (i32, i32) {
    %c0_i32 = arith.constant 0 : i32
    %c0_i32_0 = arith.constant 0 : i32
    return %c0_i32, %arg0 : i32, i32
  }
  func.func @transform_6(%arg0: i32, %arg1: i32, %arg2: memref<2xi32, #tpu.memory_space<smem>>) -> (i32, i32) {
    %c0_i32 = arith.constant 0 : i32
    return %arg1, %arg0 : i32, i32
  }
}

</mosaic_0001>

<llo_original>
// kernel: tpu_custom_call.1
$region0: #{tpu_custom_call.1}
  #allocation0 [shape = 'u32[]', space=smem, size = 0x4, offset = 0x4, fixed_abs, tag = 'smem constant byte address 0x4 - core index']
  #allocation1 [shape = 'u32[144,128]{1,0:T(1,128)}', space=vmem, size = 0x12000, scoped, tag = 'internal scratch']
  #allocation2 [shape = 's32[1]{0}', space=sflag, size = 0x4, scoped, tag = 'scoped memory for tpu_custom_call.1']
  #allocation3 [shape = 'u8[512]{0}', space=smem, size = 0x200, scoped, tag = 'prefetched SMEM operand 0']
  %s0 = inlined_call_operand.vmem [shape: s32[2], index: 0, kind: input, shape index: {}]
  %s1 = inlined_call_operand.hbm [shape: f32[16,64], index: 1, kind: input, shape index: {}]
  %s2 = inlined_call_operand.hbm [shape: f32[16,16], index: 2, kind: input, shape index: {}]
  %s3 = inlined_call_operand.vmem [shape: f32[16,8], index: 3, kind: input, shape index: {}]
  %s4 = inlined_call_operand.hbm [shape: f32[64,256], index: 4, kind: input, shape index: {}]
  %s5 = inlined_call_operand.vmem [shape: f32[16,256], index: 5, kind: input, shape index: {}]
  %s6 = inlined_call_operand.vmem [shape: f32[1,256], index: 6, kind: input, shape index: {}]
  %s7 = inlined_call_operand.hbm [shape: f32[16,256], index: 7, kind: output, shape index: {}]
  %s8 = sld [smem:[#allocation0]]
  $region127: #{tpu_custom_call.1} parent=0
    _
  %s10 = ssub.s32 1, %s8
  %s11 = scalar_select 0, %s10, %s8
  %s12 = sshll.u32 %s0, 4
  %s13 = int_to_ptr.vmem [resolvable:$true] %s12
  %15 = dma.vmem_to_smem %s13, 16, [#allocation3], [#allocation2]
  %16 = dma.done [#allocation2], 16
  %17 = sfence
  $region1: #{tpu_custom_call.1} parent=0
    #allocation4 [shape = 'u8[8192]{0}', space=vmem, size = 0x2000, scoped, tag = 'input window, operand 1, single buffered']
    #allocation5 [shape = 's32[2]{0}', space=sflag, size = 0x8, scoped, tag = 'scoped memory for tpu_custom_call.1']
    #allocation6 [shape = 's32[2]{0}', space=sflag, size = 0x8, scoped, tag = 'scoped memory for tpu_custom_call.1']
    #allocation7 [shape = 'u8[8192]{0}', space=vmem, size = 0x2000, scoped, tag = 'input window, operand 2, single buffered']
    #allocation8 [shape = 's32[1]{0}', space=sflag, size = 0x4, scoped, tag = 'scoped memory for tpu_custom_call.1']
    #allocation9 [shape = 'u8[65536]{0}', space=vmem, size = 0x10000, scoped, tag = 'input window, operand 4']
    #allocation10 [shape = 'u8[16384]{0}', space=vmem, size = 0x4000, scoped, tag = 'input window, operand 5']
    #allocation11 [shape = 'u8[16384]{0}', space=vmem, size = 0x4000, scoped, tag = 'output window, operand 0']
    %18 = vsyncpa [#allocation5], 0
    %19 = vsyncpa [#allocation8], 0
    %20 = vsyncpa [#allocation6], 0
    %s21 = scalar_lea.sflag [#allocation6], 1
    %22 = vsyncpa %s21, 0
    loop: start=0, step=1, limit=4
    $region2: #{tpu_custom_call.1} parent=1 // loop_pre_header
      _
    $region3: #{tpu_custom_call.1} parent=1 // loop_header
      %s24 = sphi 0, %s28
      %p25 = scmp.ge.s32.totalorder %s24, 4
      %s31 = sphi 0, %s43
      %s32 = sphi 0, %s39
      %s33 = sphi 0, %s31
      %s34 = sphi 0, %s32
      %s35 = sphi 0, %s33
      %s36 = sphi 0, %s34
      %s46 = sphi 0, %s48
      %s49 = sphi 0, %s46
      %s50 = sphi 0, %s49
      %s66 = sphi 0, %s50
      %s72 = sphi 0, %s74
      %s75 = sphi 0, %s72
      %s76 = sphi 0, %s75
      %s92 = sphi 0, %s76
      %s98 = sphi 0, %s100
      %s101 = sphi 0, %s98
      %s102 = sphi 0, %s101
      %s118 = sphi 0, %s102
      %s124 = sphi 0, %s126
      %s127 = sphi 0, %s124
      %s128 = sphi 0, %s127
      %s144 = sphi 0, %s128
      %s150 = sphi 0, %s152
      %s153 = sphi 0, %s150
      %s154 = sphi 0, %s153
      %s170 = sphi 0, %s154
      %s176 = sphi 0, %s178
      %s179 = sphi 0, %s176
      %s180 = sphi 0, %s179
      %s196 = sphi 0, %s180
      %s204 = sphi 0, %s206
      %s207 = sphi 0, %s204
      %s208 = sphi 0, %s207
      %s224 = sphi 0, %s208
    $region4: #{tpu_custom_call.1} parent=1 // loop_header_branch
      %27 = sbr.rel (%p25) target = $region8
    $region5: #{tpu_custom_call.1} parent=1 // loop_body
      %s29 = ssub.s32 %s24, 1
      %s30 = ssub.s32 %s24, 2
      %s37 = sadd.s32 1, %s32
      %p38 = scmp.ge.s32.totalorder %s37, 1
      %s39 = scalar_select %p38, 0, %s37
      %s40 = sadd.s32 1, %s31
      %s41 = scalar_select %p38, %s40, %s31
      %p42 = scmp.ge.s32.totalorder %s41, 2
      %s43 = scalar_select %p42, 0, %s41
      %s44 = ssub.s32 %s32, %s39
      %p45 = scmp.eq.s32.totalorder %s44, 0
      %s47 = sadd.s32 %s46, 1
      %s48 = scalar_select %p45, %s46, %s47
      %p51 = pneg %p45
      %p52 = scmp.eq.s32.totalorder %s24, 1
      %p53 = por %p51, %p52
      %p54 = scmp.ne.s32.totalorder %s46, %s49
      %p55 = scmp.eq.s32.totalorder %s24, 0
      %p56 = por %p54, %p55
      %p57 = scmp.ne.s32.totalorder %s46, %s49
      %p58 = scmp.eq.s32.totalorder %s29, 1
      %p59 = por %p57, %p58
      %p60 = scmp.ne.s32.totalorder %s49, %s50
      %p61 = scmp.eq.s32.totalorder %s29, 0
      %p62 = por %p60, %p61
      %p63 = scmp.ne.s32.totalorder %s49, %s50
      %p64 = scmp.eq.s32.totalorder %s30, 1
      %p65 = por %p63, %p64
      %p67 = scmp.ne.s32.totalorder %s50, %s66
      %p68 = scmp.eq.s32.totalorder %s30, 0
      %p69 = por %p67, %p68
      %s70 = ssub.s32 %s32, %s39
      %p71 = scmp.eq.s32.totalorder %s70, 0
      %s73 = sadd.s32 %s72, 1
      %s74 = scalar_select %p71, %s72, %s73
      %p77 = pneg %p71
      %p78 = scmp.eq.s32.totalorder %s24, 1
      %p79 = por %p77, %p78
      %p80 = scmp.ne.s32.totalorder %s72, %s75
      %p81 = scmp.eq.s32.totalorder %s24, 0
      %p82 = por %p80, %p81
      %p83 = scmp.ne.s32.totalorder %s72, %s75
      %p84 = scmp.eq.s32.totalorder %s29, 1
      %p85 = por %p83, %p84
      %p86 = scmp.ne.s32.totalorder %s75, %s76
      %p87 = scmp.eq.s32.totalorder %s29, 0
      %p88 = por %p86, %p87
      %p89 = scmp.ne.s32.totalorder %s75, %s76
      %p90 = scmp.eq.s32.totalorder %s30, 1
      %p91 = por %p89, %p90
      %p93 = scmp.ne.s32.totalorder %s76, %s92
      %p94 = scmp.eq.s32.totalorder %s30, 0
      %p95 = por %p93, %p94
      %s96 = ssub.s32 %s32, %s39
      %p97 = scmp.eq.s32.totalorder %s96, 0
      %s99 = sadd.s32 %s98, 1
      %s100 = scalar_select %p97, %s98, %s99
      %p103 = pneg %p97
      %p104 = scmp.eq.s32.totalorder %s24, 1
      %p105 = por %p103, %p104
      %p106 = scmp.ne.s32.totalorder %s98, %s101
      %p107 = scmp.eq.s32.totalorder %s24, 0
      %p108 = por %p106, %p107
      %p109 = scmp.ne.s32.totalorder %s98, %s101
      %p110 = scmp.eq.s32.totalorder %s29, 1
      %p111 = por %p109, %p110
      %p112 = scmp.ne.s32.totalorder %s101, %s102
      %p113 = scmp.eq.s32.totalorder %s29, 0
      %p114 = por %p112, %p113
      %p115 = scmp.ne.s32.totalorder %s101, %s102
      %p116 = scmp.eq.s32.totalorder %s30, 1
      %p117 = por %p115, %p116
      %p119 = scmp.ne.s32.totalorder %s102, %s118
      %p120 = scmp.eq.s32.totalorder %s30, 0
      %p121 = por %p119, %p120
      %s122 = ssub.s32 %s31, %s43
      %p123 = scmp.eq.s32.totalorder %s122, 0
      %s125 = sadd.s32 %s124, 1
      %s126 = scalar_select %p123, %s124, %s125
      %p129 = pneg %p123
      %p130 = scmp.eq.s32.totalorder %s24, 1
      %p131 = por %p129, %p130
      %p132 = scmp.ne.s32.totalorder %s124, %s127
      %p133 = scmp.eq.s32.totalorder %s24, 0
      %p134 = por %p132, %p133
      %p135 = scmp.ne.s32.totalorder %s124, %s127
      %p136 = scmp.eq.s32.totalorder %s29, 1
      %p137 = por %p135, %p136
      %p138 = scmp.ne.s32.totalorder %s127, %s128
      %p139 = scmp.eq.s32.totalorder %s29, 0
      %p140 = por %p138, %p139
      %p141 = scmp.ne.s32.totalorder %s127, %s128
      %p142 = scmp.eq.s32.totalorder %s30, 1
      %p143 = por %p141, %p142
      %p145 = scmp.ne.s32.totalorder %s128, %s144
      %p146 = scmp.eq.s32.totalorder %s30, 0
      %p147 = por %p145, %p146
      %s148 = ssub.s32 %s31, %s43
      %p149 = scmp.eq.s32.totalorder %s148, 0
      %s151 = sadd.s32 %s150, 1
      %s152 = scalar_select %p149, %s150, %s151
      %p155 = pneg %p149
      %p156 = scmp.eq.s32.totalorder %s24, 1
      %p157 = por %p155, %p156
      %p158 = scmp.ne.s32.totalorder %s150, %s153
      %p159 = scmp.eq.s32.totalorder %s24, 0
      %p160 = por %p158, %p159
      %p161 = scmp.ne.s32.totalorder %s150, %s153
      %p162 = scmp.eq.s32.totalorder %s29, 1
      %p163 = por %p161, %p162
      %p164 = scmp.ne.s32.totalorder %s153, %s154
      %p165 = scmp.eq.s32.totalorder %s29, 0
      %p166 = por %p164, %p165
      %p167 = scmp.ne.s32.totalorder %s153, %s154
      %p168 = scmp.eq.s32.totalorder %s30, 1
      %p169 = por %p167, %p168
      %p171 = scmp.ne.s32.totalorder %s154, %s170
      %p172 = scmp.eq.s32.totalorder %s30, 0
      %p173 = por %p171, %p172
      %s174 = ssub.s32 %s31, %s43
      %p175 = scmp.eq.s32.totalorder %s174, 0
      %s177 = sadd.s32 %s176, 1
      %s178 = scalar_select %p175, %s176, %s177
      %p181 = pneg %p175
      %p182 = scmp.eq.s32.totalorder %s24, 1
      %p183 = por %p181, %p182
      %p184 = scmp.ne.s32.totalorder %s176, %s179
      %p185 = scmp.eq.s32.totalorder %s24, 0
      %p186 = por %p184, %p185
      %p187 = scmp.ne.s32.totalorder %s176, %s179
      %p188 = scmp.eq.s32.totalorder %s29, 1
      %p189 = por %p187, %p188
      %p190 = scmp.ne.s32.totalorder %s179, %s180
      %p191 = scmp.eq.s32.totalorder %s29, 0
      %p192 = por %p190, %p191
      %p193 = scmp.ne.s32.totalorder %s179, %s180
      %p194 = scmp.eq.s32.totalorder %s30, 1
      %p195 = por %p193, %p194
      %p197 = scmp.ne.s32.totalorder %s180, %s196
      %p198 = scmp.eq.s32.totalorder %s30, 0
      %p199 = por %p197, %p198
      %s200 = ssub.s32 %s32, %s39
      %s201 = ssub.s32 %s31, %s43
      %s202 = sor.u32 %s200, %s201
      %p203 = scmp.eq.s32.totalorder %s202, 0
      %s205 = sadd.s32 %s204, 1
      %s206 = scalar_select %p203, %s204, %s205
      %p209 = pneg %p203
      %p210 = scmp.eq.s32.totalorder %s24, 1
      %p211 = por %p209, %p210
      %p212 = scmp.ne.s32.totalorder %s204, %s207
      %p213 = scmp.eq.s32.totalorder %s24, 0
      %p214 = por %p212, %p213
      %p215 = scmp.ne.s32.totalorder %s204, %s207
      %p216 = scmp.eq.s32.totalorder %s29, 1
      %p217 = por %p215, %p216
      %p218 = scmp.ne.s32.totalorder %s207, %s208
      %p219 = scmp.eq.s32.totalorder %s29, 0
      %p220 = por %p218, %p219
      %p221 = scmp.ne.s32.totalorder %s207, %s208
      %p222 = scmp.eq.s32.totalorder %s30, 1
      %p223 = por %p221, %p222
      %p225 = scmp.ne.s32.totalorder %s208, %s224
      %p226 = scmp.eq.s32.totalorder %s30, 0
      %p227 = por %p225, %p226
      %p228 = scmp.le.s32.totalorder 1, %s24
      %p229 = scmp.lt.s32.totalorder %s24, 3
      %p230 = pnand %p228, %p229
      %p231 = pneg %p230
      // Predicated region
      $region9: #{tpu_custom_call.1} parent=5 // pred_check
        _
      $region10: #{tpu_custom_call.1} parent=5 // pred_check_branch
        %233 = sbr.rel (%p230) target = $region12
      $region11: #{tpu_custom_call.1} parent=5 // pred_region
        %s234 = ssub.s32 %s24, 1
        // Predicated region
        $region13: #{tpu_custom_call.1} parent=11 // pred_check
          %p235 = pneg %p62
        $region14: #{tpu_custom_call.1} parent=11 // pred_check_branch
          %237 = sbr.rel (%p235) target = $region16
        $region15: #{tpu_custom_call.1} parent=11 // pred_region
          %s238 = smul.u32 2, %s34
          %s240 = ssub.s32 256, 256
          %241 = vsyncadd [#allocation5], %s240
          %s242 = smul.addr %s238, 128
          %s243 = scalar_lea.hbm %s1, %s242
          %s244 = sshll.u32 [#allocation4], 4
          %s245 = int_to_ptr.vmem [resolvable:$true] %s244
          %250 = dma.hbm_to_vmem [thread:$0]  %s243, 256, %s245, [#allocation5], 128, 128, 8
        $region16: #{tpu_custom_call.1} parent=11 // pred_fallthru
          _
        // Predicated region
        $region17: #{tpu_custom_call.1} parent=11 // pred_check
          %p251 = pneg %p88
        $region18: #{tpu_custom_call.1} parent=11 // pred_check_branch
          %253 = sbr.rel (%p251) target = $region20
        $region19: #{tpu_custom_call.1} parent=11 // pred_region
          %s254 = smul.u32 2, %s34
          %s256 = ssub.s32 256, 256
          %257 = vsyncadd [#allocation8], %s256
          %s258 = smul.addr %s254, 128
          %s259 = scalar_lea.hbm %s2, %s258
          %s260 = sshll.u32 [#allocation7], 4
          %s261 = int_to_ptr.vmem [resolvable:$true] %s260
          %266 = dma.hbm_to_vmem [thread:$0]  %s259, 256, %s261, [#allocation8], 128, 128, 8
        $region20: #{tpu_custom_call.1} parent=11 // pred_fallthru
          _
        // Predicated region
        $region21: #{tpu_custom_call.1} parent=11 // pred_check
          %p267 = pneg %p114
        $region22: #{tpu_custom_call.1} parent=11 // pred_check_branch
          %269 = sbr.rel (%p267) target = $region24
        $region23: #{tpu_custom_call.1} parent=11 // pred_region
          %s270 = smul.u32 2, %s34
          %p271 = scmp.lt.s32.totalorder %s270, 1
          %s272 = scalar_select %p271, %s270, 1
          %s273 = smul.addr %s272, 8
          %s274 = scalar_lea.vmem %s3, %s273
          %s275 = smul.u32 2, %s34
        $region24: #{tpu_custom_call.1} parent=11 // pred_fallthru
          _
      $region12: #{tpu_custom_call.1} parent=5 // pred_fallthru
        _
      %p276 = scmp.lt.s32.totalorder %s24, 2
      // Predicated region
      $region25: #{tpu_custom_call.1} parent=5 // pred_check
        %p277 = pneg %p276
      $region26: #{tpu_custom_call.1} parent=5 // pred_check_branch
        %279 = sbr.rel (%p277) target = $region28
      $region27: #{tpu_custom_call.1} parent=5 // pred_region
        // Predicated region
        $region29: #{tpu_custom_call.1} parent=27 // pred_check
          %p280 = pneg %p134
        $region30: #{tpu_custom_call.1} parent=27 // pred_check_branch
          %282 = sbr.rel (%p280) target = $region32
        $region31: #{tpu_custom_call.1} parent=27 // pred_region
          %s283 = sand.u32 %s24, 1
          %s284 = scalar_lea.sflag [#allocation5], %s283
          %s285 = sand.u32 %s124, 1
          %s286 = smul.addr %s285, 64
          %s287 = scalar_lea.vmem [#allocation9], %s286
          %s289 = ssub.s32 1024, 1024
          %290 = vsyncadd %s284, %s289
          %s291 = smul.addr %s31, 128
          %s292 = scalar_lea.hbm %s4, %s291
          %s293 = sshll.u32 %s287, 4
          %s294 = int_to_ptr.vmem [resolvable:$true] %s293
          %299 = dma.hbm_to_vmem [thread:$0]  %s292, 1024, %s294, %s284, 256, 128, 8
        $region32: #{tpu_custom_call.1} parent=27 // pred_fallthru
          _
        // Predicated region
        $region33: #{tpu_custom_call.1} parent=27 // pred_check
          %p300 = pneg %p160
        $region34: #{tpu_custom_call.1} parent=27 // pred_check_branch
          %302 = sbr.rel (%p300) target = $region36
        $region35: #{tpu_custom_call.1} parent=27 // pred_region
          %s303 = sand.u32 %s150, 1
          %s304 = sand.u32 %s150, 1
          %s305 = smul.addr %s304, 16
          %s306 = scalar_lea.vmem [#allocation10], %s305
          %s307 = smul.addr %s31, 8
          %s308 = scalar_lea.vmem %s5, %s307
          // Predicated region
          $region37: #{tpu_custom_call.1} parent=35 // pred_check
            _
          $region38: #{tpu_custom_call.1} parent=35 // pred_check_branch
            %310 = sbr.rel (0) target = $region40
          $region39: #{tpu_custom_call.1} parent=35 // pred_region
            // Predicated region
            $region41: #{tpu_custom_call.1} parent=39 // pred_check
              _
            $region42: #{tpu_custom_call.1} parent=39 // pred_check_branch
              %312 = sbr.rel (0) target = $region44
            $region43: #{tpu_custom_call.1} parent=39 // pred_region
              // Predicated region
              $region56: #{tpu_custom_call.1} parent=43 // pred_check
                _
              $region57: #{tpu_custom_call.1} parent=43 // pred_check_branch
                %329 = sbr.rel (0) target = $region59
              $region58: #{tpu_custom_call.1} parent=43 // pred_region
                loop: start=0, step=1, limit=1
                $region60: #{tpu_custom_call.1} parent=58 // loop_pre_header
                  _
                $region61: #{tpu_custom_call.1} parent=58 // loop_header
                  %s331 = sphi 0, %s335
                  %p332 = scmp.ge.s32.totalorder %s331, 1
                  %s336 = sphi %s308, %s308
                  %s337 = sphi %s306, %s306
                $region62: #{tpu_custom_call.1} parent=58 // loop_header_branch
                  %334 = sbr.rel (%p332) target = $region66
                $region63: #{tpu_custom_call.1} parent=58 // loop_body
                  %v338 = vld [vmem:[%s336] sm:$0xff]
                  %339 = vst [vmem:[%s337] sm:$0xff] %v338
                  %v340 = vld [vmem:[%s336 + $0x10] sm:$0xff]
                  %341 = vst [vmem:[%s337 + $0x8] sm:$0xff] %v340
                $region64: #{tpu_custom_call.1} parent=58 // loop_footer
                  %s335 = sadd.s32 1, %s331
                $region65: #{tpu_custom_call.1} parent=58 // loop_footer_branch
                  %330 = sbr.rel target = $region61
                $region66: #{tpu_custom_call.1} parent=58 // loop_exit
                  _
              $region59: #{tpu_custom_call.1} parent=43 // pred_fallthru
                _
              // Predicated region
              $region67: #{tpu_custom_call.1} parent=43 // pred_check
                _
              $region68: #{tpu_custom_call.1} parent=43 // pred_check_branch
                %343 = sbr.rel target = $region70
              $region69: #{tpu_custom_call.1} parent=43 // pred_region
                _
              $region70: #{tpu_custom_call.1} parent=43 // pred_fallthru
                _
            $region44: #{tpu_custom_call.1} parent=39 // pred_fallthru
              _
            // Predicated region
            $region45: #{tpu_custom_call.1} parent=39 // pred_check
              _
            $region46: #{tpu_custom_call.1} parent=39 // pred_check_branch
              %314 = sbr.rel target = $region48
            $region47: #{tpu_custom_call.1} parent=39 // pred_region
              loop: start=0, step=1, limit=1
              $region49: #{tpu_custom_call.1} parent=47 // loop_pre_header
                _
              $region50: #{tpu_custom_call.1} parent=47 // loop_header
                %s317 = sphi 0, %s321
                %p318 = scmp.ge.s32.totalorder %s317, 1
                %s322 = sphi %s308, %s308
                %s323 = sphi %s306, %s306
              $region51: #{tpu_custom_call.1} parent=47 // loop_header_branch
                %320 = sbr.rel (%p318) target = $region55
              $region52: #{tpu_custom_call.1} parent=47 // loop_body
                %v324 = vld [vmem:[%s322] sm:$0xff]
                %325 = vst [vmem:[%s323] sm:$0xff] %v324
                %v326 = vld [vmem:[%s322 + $0x10] sm:$0xff]
                %327 = vst [vmem:[%s323 + $0x8] sm:$0xff] %v326
              $region53: #{tpu_custom_call.1} parent=47 // loop_footer
                %s321 = sadd.s32 1, %s317
              $region54: #{tpu_custom_call.1} parent=47 // loop_footer_branch
                %316 = sbr.rel target = $region50
              $region55: #{tpu_custom_call.1} parent=47 // loop_exit
                _
            $region48: #{tpu_custom_call.1} parent=39 // pred_fallthru
              _
          $region40: #{tpu_custom_call.1} parent=35 // pred_fallthru
            _
          %344 = vnop
        $region36: #{tpu_custom_call.1} parent=27 // pred_fallthru
          _
        // Predicated region
        $region71: #{tpu_custom_call.1} parent=27 // pred_check
          %p345 = pneg %p186
        $region72: #{tpu_custom_call.1} parent=27 // pred_check_branch
          %347 = sbr.rel (%p345) target = $region74
        $region73: #{tpu_custom_call.1} parent=27 // pred_region
          %p348 = scmp.lt.s32.totalorder %s31, 1
          %s349 = scalar_select %p348, %s31, 1
          %s350 = scalar_lea.vmem %s6, %s349
        $region74: #{tpu_custom_call.1} parent=27 // pred_fallthru
          _
      $region28: #{tpu_custom_call.1} parent=5 // pred_fallthru
        _
      %p351 = scmp.le.s32.totalorder 1, %s24
      %p352 = scmp.lt.s32.totalorder %s24, 3
      %p353 = pnand %p351, %p352
      %p354 = pneg %p353
      // Predicated region
      $region75: #{tpu_custom_call.1} parent=5 // pred_check
        _
      $region76: #{tpu_custom_call.1} parent=5 // pred_check_branch
        %356 = sbr.rel (%p353) target = $region78
      $region77: #{tpu_custom_call.1} parent=5 // pred_region
        %s357 = ssub.s32 %s24, 1
        // Predicated region
        $region79: #{tpu_custom_call.1} parent=77 // pred_check
          %p358 = pneg %p62
        $region80: #{tpu_custom_call.1} parent=77 // pred_check_branch
          %360 = sbr.rel (%p358) target = $region82
        $region81: #{tpu_custom_call.1} parent=77 // pred_region
          %361 = dma.done [#allocation5], 256
        $region82: #{tpu_custom_call.1} parent=77 // pred_fallthru
          _
        // Predicated region
        $region83: #{tpu_custom_call.1} parent=77 // pred_check
          %p362 = pneg %p88
        $region84: #{tpu_custom_call.1} parent=77 // pred_check_branch
          %364 = sbr.rel (%p362) target = $region86
        $region85: #{tpu_custom_call.1} parent=77 // pred_region
          %365 = dma.done [#allocation8], 256
        $region86: #{tpu_custom_call.1} parent=77 // pred_fallthru
          _
        %s366 = sand.u32 %s29, 1
        %s367 = scalar_lea.sflag [#allocation5], %s366
        %s368 = sand.u32 %s127, 1
        %s369 = smul.addr %s368, 64
        %s370 = scalar_lea.vmem [#allocation9], %s369
        // Predicated region
        $region87: #{tpu_custom_call.1} parent=77 // pred_check
          %p371 = pneg %p140
        $region88: #{tpu_custom_call.1} parent=77 // pred_check_branch
          %373 = sbr.rel (%p371) target = $region90
        $region89: #{tpu_custom_call.1} parent=77 // pred_region
          %374 = dma.done %s367, 1024
        $region90: #{tpu_custom_call.1} parent=77 // pred_fallthru
          _
        %s375 = sand.u32 %s153, 1
        %s376 = sand.u32 %s153, 1
        %s377 = smul.addr %s376, 16
        %s378 = scalar_lea.vmem [#allocation10], %s377
        // Predicated region
        $region91: #{tpu_custom_call.1} parent=77 // pred_check
          %p379 = pneg %p166
        $region92: #{tpu_custom_call.1} parent=77 // pred_check_branch
          %381 = sbr.rel (%p379) target = $region94
        $region93: #{tpu_custom_call.1} parent=77 // pred_region
          _
        $region94: #{tpu_custom_call.1} parent=77 // pred_fallthru
          _
        %p382 = pneg %p62
        %p383 = pneg %p59
        %p384 = pneg %p88
        %p385 = pneg %p85
        %s386 = smul.u32 2, %s34
        %p387 = scmp.lt.s32.totalorder %s386, 1
        %s388 = scalar_select %p387, %s386, 1
        %s389 = smul.addr %s388, 8
        %s390 = scalar_lea.vmem %s3, %s389
        %p391 = pneg %p114
        %p392 = pneg %p111
        %s393 = sand.u32 %s29, 1
        %s394 = scalar_lea.sflag [#allocation5], %s393
        %s395 = sand.u32 %s127, 1
        %s396 = smul.addr %s395, 64
        %s397 = scalar_lea.vmem [#allocation9], %s396
        %p398 = pneg %p140
        %p399 = pneg %p137
        %s400 = sand.u32 %s153, 1
        %s401 = sand.u32 %s153, 1
        %s402 = smul.addr %s401, 16
        %s403 = scalar_lea.vmem [#allocation10], %s402
        %p404 = pneg %p166
        %p405 = pneg %p163
        %p406 = scmp.lt.s32.totalorder %s33, 1
        %s407 = scalar_select %p406, %s33, 1
        %s408 = scalar_lea.vmem %s6, %s407
        %p409 = pneg %p192
        %p410 = pneg %p189
        %p411 = pneg %p220
        %p412 = pneg %p217
        %s413 = sand.u32 %s207, 1
        %s414 = scalar_lea.sflag [#allocation6], %s413
        %s415 = sand.u32 %s207, 1
        %s416 = smul.addr %s415, 16
        %s417 = scalar_lea.vmem [#allocation11], %s416
        %s418 = smul.u32 2, %s34
        %s419 = smul.u32 2, %s34
        %s420 = smul.u32 2, %s34
        %p421 = scmp.lt.s32.totalorder %s420, 1
        %s422 = scalar_select %p421, %s420, 1
        %s423 = smul.addr %s422, 8
        %s424 = scalar_lea.vmem %s3, %s423
        %s425 = smul.u32 2, %s34
        %p426 = scmp.lt.s32.totalorder %s33, 1
        %s427 = scalar_select %p426, %s33, 1
        %s428 = scalar_lea.vmem %s6, %s427
        %s429 = smul.u32 2, %s34
        %s430 = smul.u32 %s34, 2
        %s431 = sld [smem:[#allocation3 + %s430]]
        %p432 = scmp.ne.s32.totalorder %s431, 0
        %s433 = sadd.s32 %s430, 1
        %s434 = sld [smem:[#allocation3 + %s433]]
        %p435 = scmp.ne.s32.totalorder %s434, 0
        %p436 = por %p432, %p435
        %p437 = pneg %p436
        // Predicated region
        $region95: #{tpu_custom_call.1} parent=77 // pred_check
          _
        $region96: #{tpu_custom_call.1} parent=77 // pred_check_branch
          %439 = sbr.rel (%p436) target = $region98
        $region97: #{tpu_custom_call.1} parent=77 // pred_region
          %440 = vst [vmem:[%s417] sm:$0xff] 0.0
          %441 = vst [vmem:[%s417 + $0x8] sm:$0xff] 0.0
        $region98: #{tpu_custom_call.1} parent=77 // pred_fallthru
          _
        // Predicated region
        $region99: #{tpu_custom_call.1} parent=77 // pred_check
          %p442 = pneg %p432
        $region100: #{tpu_custom_call.1} parent=77 // pred_check_branch
          %444 = sbr.rel (%p442) target = $region102
        $region101: #{tpu_custom_call.1} parent=77 // pred_region
          %v445 = vld [vmem:[#allocation4] sm:$0xff]
          %v446 = vld [vmem:[#allocation4 + $0x8] sm:$0xff]
          %v447 = vld [vmem:[%s370] sm:$0xff]
          %v448 = vld [vmem:[%s370 + $0x8] sm:$0xff]
          %v449 = vld [vmem:[%s370 + $0x10] sm:$0xff]
          %v450 = vld [vmem:[%s370 + $0x18] sm:$0xff]
          %v451 = vld [vmem:[%s370 + $0x20] sm:$0xff]
          %v452 = vld [vmem:[%s370 + $0x28] sm:$0xff]
          %v453 = vld [vmem:[%s370 + $0x30] sm:$0xff]
          %v454 = vld [vmem:[%s370 + $0x38] sm:$0xff]
          %vm455 = vcmask 523264
          %v457 = vsel %vm455, %v445, 0
          %v460 = vsel %vm455, %v446, 0
          %462 = vmatprep.subr.mxu0 0.0
          %463 = vmatpush1.msra.mxu0 %v447
          %464 = vmatprep.subr.mxu0 0.0
          %465 = vmatpush1.msra.mxu0 %v448
          %466 = vmatprep.subr.mxu0 0.0
          %467 = vmatpush1.msra.mxu0 %v449
          %468 = vmatprep.subr.mxu0 0.0
          %469 = vmatpush1.msra.mxu0 %v450
          %470 = vmatprep.subr.mxu0 0.0
          %471 = vmatpush1.msra.mxu0 %v451
          %472 = vmatprep.subr.mxu0 0.0
          %473 = vmatpush1.msra.mxu0 %v452
          %474 = vmatprep.subr.mxu0 0.0
          %475 = vmatpush1.msra.mxu0 %v453
          %476 = vmatprep.subr.mxu0 0.0
          %477 = vmatpush1.msra.mxu0 %v454
          %478 = vmatprep.subr.mxu0 0.0
          %479 = vmatpush1.msra.mxu0 0.0
          %480 = vmatprep.subr.mxu0 0.0
          %481 = vmatpush1.msra.mxu0 0.0
          %482 = vmatprep.subr.mxu0 0.0
          %483 = vmatpush1.msra.mxu0 0.0
          %484 = vmatprep.subr.mxu0 0.0
          %485 = vmatpush1.msra.mxu0 0.0
          %486 = vmatprep.subr.mxu0 0.0
          %487 = vmatpush1.msra.mxu0 0.0
          %488 = vmatprep.subr.mxu0 0.0
          %489 = vmatpush1.msra.mxu0 0.0
          %490 = vmatprep.subr.mxu0 0.0
          %491 = vmatpush1.msra.mxu0 0.0
          %492 = vmatprep.subr.mxu0 0.0
          %493 = vmatpush1.msra.mxu0 0.0
          %494 = vmatprep.subr.mxu0 0.0
          %495 = vmatpush1.msra.mxu0 0.0
          %496 = vmatprep.subr.mxu0 0.0
          %497 = vmatpush1.msra.mxu0 0.0
          %498 = vmatprep.subr.mxu0 0.0
          %499 = vmatpush1.msra.mxu0 0.0
          %500 = vmatprep.subr.mxu0 0.0
          %501 = vmatpush1.msra.mxu0 0.0
          %502 = vmatprep.subr.mxu0 0.0
          %503 = vmatpush1.msra.mxu0 0.0
          %504 = vmatprep.subr.mxu0 0.0
          %505 = vmatpush1.msra.mxu0 0.0
          %506 = vmatprep.subr.mxu0 0.0
          %507 = vmatpush1.msra.mxu0 0.0
          %508 = vmatprep.subr.mxu0 0.0
          %509 = vmatpush1.msra.mxu0 0.0
          %510 = vmatprep.subr.mxu0 0.0
          %511 = vmatpush1.msra.mxu0 0.0
          %512 = vmatprep.subr.mxu0 0.0
          %513 = vmatpush1.msra.mxu0 0.0
          %514 = vmatprep.subr.mxu0 0.0
          %515 = vmatpush1.msra.mxu0 0.0
          %516 = vmatprep.subr.mxu0 0.0
          %517 = vmatpush1.msra.mxu0 0.0
          %518 = vmatprep.subr.mxu0 0.0
          %519 = vmatpush1.msra.mxu0 0.0
          %520 = vmatprep.subr.mxu0 0.0
          %521 = vmatpush1.msra.mxu0 0.0
          %522 = vmatprep.subr.mxu0 0.0
          %523 = vmatpush1.msra.mxu0 0.0
          %524 = vmatprep.subr.mxu0 0.0
          %525 = vmatpush1.msra.mxu0 0.0
          %526 = vmatprep.mubr.f32.mxu0 0.0
          %527 = vmatmul.mubr.f32.gmra.mrb[0].mxu0 %v457
          %v528 = vpop.f32.mrb[0].mxu0
          %v529 = vadd.f32 0.0, %v528
          %v530 = vpop.f32.mrb[0].mxu0
          %531 = vmatprep.mubr.f32.mxu0 0.0
          %532 = vmatmul.mubr.f32.gmra.mrb[0].mxu0 %v460
          %v533 = vpop.f32.mrb[0].mxu0
          %v534 = vadd.f32 0.0, %v533
          %v535 = vpop.f32.mrb[0].mxu0
          %536 = vdwg.mxu0
          %537 = vst [vmem:[%s417] sm:$0xff] %v529
          %538 = vst [vmem:[%s417 + $0x8] sm:$0xff] %v534
        $region102: #{tpu_custom_call.1} parent=77 // pred_fallthru
          _
        // Predicated region
        $region103: #{tpu_custom_call.1} parent=77 // pred_check
          %p539 = pneg %p435
        $region104: #{tpu_custom_call.1} parent=77 // pred_check_branch
          %541 = sbr.rel (%p539) target = $region106
        $region105: #{tpu_custom_call.1} parent=77 // pred_region
          %v542 = vld [vmem:[%s424] sm:$0xff]
          %v543 = vld [vmem:[%s424 + $0x8] sm:$0xff]
          %v544 = vld [vmem:[%s428] sm:$0x1]
          %v545 = vld [vmem:[#allocation7] sm:$0xff]
          %v546 = vld [vmem:[#allocation7 + $0x8] sm:$0xff]
          %v547 = vld [vmem:[%s378] sm:$0xff]
          %v548 = vld [vmem:[%s378 + $0x8] sm:$0xff]
          %vm549 = vcmask 130048
          %v551 = vsel %vm549, %v545, 0
          %v554 = vsel %vm549, %v546, 0
          %556 = vmatprep.subr.mxu0 0.0
          %557 = vmatpush1.msra.mxu0 %v547
          %558 = vmatprep.subr.mxu0 0.0
          %559 = vmatpush1.msra.mxu0 %v548
          %560 = vmatprep.subr.mxu0 0.0
          %561 = vmatpush1.msra.mxu0 0.0
          %562 = vmatprep.subr.mxu0 0.0
          %563 = vmatpush1.msra.mxu0 0.0
          %564 = vmatprep.subr.mxu0 0.0
          %565 = vmatpush1.msra.mxu0 0.0
          %566 = vmatprep.subr.mxu0 0.0
          %567 = vmatpush1.msra.mxu0 0.0
          %568 = vmatprep.subr.mxu0 0.0
          %569 = vmatpush1.msra.mxu0 0.0
          %570 = vmatprep.subr.mxu0 0.0
          %571 = vmatpush1.msra.mxu0 0.0
          %572 = vmatprep.subr.mxu0 0.0
          %573 = vmatpush1.msra.mxu0 0.0
          %574 = vmatprep.subr.mxu0 0.0
          %575 = vmatpush1.msra.mxu0 0.0
          %576 = vmatprep.subr.mxu0 0.0
          %577 = vmatpush1.msra.mxu0 0.0
          %578 = vmatprep.subr.mxu0 0.0
          %579 = vmatpush1.msra.mxu0 0.0
          %580 = vmatprep.subr.mxu0 0.0
          %581 = vmatpush1.msra.mxu0 0.0
          %582 = vmatprep.subr.mxu0 0.0
          %583 = vmatpush1.msra.mxu0 0.0
          %584 = vmatprep.subr.mxu0 0.0
          %585 = vmatpush1.msra.mxu0 0.0
          %586 = vmatprep.subr.mxu0 0.0
          %587 = vmatpush1.msra.mxu0 0.0
          %588 = vmatprep.subr.mxu0 0.0
          %589 = vmatpush1.msra.mxu0 0.0
          %590 = vmatprep.subr.mxu0 0.0
          %591 = vmatpush1.msra.mxu0 0.0
          %592 = vmatprep.subr.mxu0 0.0
          %593 = vmatpush1.msra.mxu0 0.0
          %594 = vmatprep.subr.mxu0 0.0
          %595 = vmatpush1.msra.mxu0 0.0
          %596 = vmatprep.subr.mxu0 0.0
          %597 = vmatpush1.msra.mxu0 0.0
          %598 = vmatprep.subr.mxu0 0.0
          %599 = vmatpush1.msra.mxu0 0.0
          %600 = vmatprep.subr.mxu0 0.0
          %601 = vmatpush1.msra.mxu0 0.0
          %602 = vmatprep.subr.mxu0 0.0
          %603 = vmatpush1.msra.mxu0 0.0
          %604 = vmatprep.subr.mxu0 0.0
          %605 = vmatpush1.msra.mxu0 0.0
          %606 = vmatprep.subr.mxu0 0.0
          %607 = vmatpush1.msra.mxu0 0.0
          %608 = vmatprep.subr.mxu0 0.0
          %609 = vmatpush1.msra.mxu0 0.0
          %610 = vmatprep.subr.mxu0 0.0
          %611 = vmatpush1.msra.mxu0 0.0
          %612 = vmatprep.subr.mxu0 0.0
          %613 = vmatpush1.msra.mxu0 0.0
          %614 = vmatprep.subr.mxu0 0.0
          %615 = vmatpush1.msra.mxu0 0.0
          %616 = vmatprep.subr.mxu0 0.0
          %617 = vmatpush1.msra.mxu0 0.0
          %618 = vmatprep.subr.mxu0 0.0
          %619 = vmatpush1.msra.mxu0 0.0
          %620 = vmatprep.mubr.f32.mxu0 0.0
          %621 = vmatmul.mubr.f32.gmra.mrb[0].mxu0 %v551
          %v622 = vpop.f32.mrb[0].mxu0
          %v623 = vadd.f32 0.0, %v622
          %v624 = vpop.f32.mrb[0].mxu0
          %625 = vmatprep.mubr.f32.mxu0 0.0
          %626 = vmatmul.mubr.f32.gmra.mrb[0].mxu0 %v554
          %v627 = vpop.f32.mrb[0].mxu0
          %v628 = vadd.f32 0.0, %v627
          %v629 = vpop.f32.mrb[0].mxu0
          %630 = vdwg.mxu0
          %632 = vset.pattern.permute.xlu0 2
          %633 = vperm.xlu0 %632, %v542
          %v634 = vpop.permute.xlu0 %633
          %637 = vset.pattern.permute.xlu0 2
          %638 = vperm.xlu0 %637, %v543
          %v639 = vpop.permute.xlu0 %638
          %v642 = vlaneseq
          %v643 = vshrl.u32 %v642, 7
          %v644 = vsub.s32 0, %v643
          %v645 = vrot.slane %v544, %v644
          %v647 = vmul.f32 %v634, %v645
          %v648 = vmul.f32 %v639, %v645
          %v649 = vmax.f32 %v647, -15.0
          %v650 = vmax.f32 %v648, -15.0
          %v651 = vmin.f32 %v649, 15.0
          %v652 = vmin.f32 %v650, 15.0
          %v653 = vtanh.pop %v651
          %v654 = vtanh.pop %v652
          %655 = vset.pattern.permute.xlu0 3
          %656 = vperm.xlu0 %655, %v542
          %v657 = vpop.permute.xlu0 %656
          %659 = vset.pattern.permute.xlu0 3
          %660 = vperm.xlu0 %659, %v543
          %v661 = vpop.permute.xlu0 %660
          %v663 = vmul.f32 %v653, %v657
          %v664 = vmul.f32 %v654, %v661
          %665 = vset.pattern.permute.xlu0 1
          %666 = vperm.xlu0 %665, %v542
          %v667 = vpop.permute.xlu0 %666
          %669 = vset.pattern.permute.xlu0 1
          %670 = vperm.xlu0 %669, %v543
          %v671 = vpop.permute.xlu0 %670
          %v673 = vmul.f32 %v667, %v663
          %v674 = vmul.f32 %v671, %v664
          %v675 = vmul.f32 %v673, 2.0
          %v676 = vmul.f32 %v674, 2.0
          %v677 = vmul.f32 %v675, %v623
          %v678 = vmul.f32 %v676, %v628
          %v679 = vsub.f32 1.0, %v677
          %v680 = vsub.f32 1.0, %v678
          %v681 = vmul.f32 %v673, %v663
          %v682 = vmul.f32 %v674, %v664
          %v683 = vadd.f32 %v679, %v681
          %v684 = vadd.f32 %v680, %v682
          %685 = vrot.lane.b32.xlu0 %v542, 1
          %v686 = vpop.permute.xlu0 %685
          %687 = vrot.lane.b32.xlu0 %v543, 1
          %v688 = vpop.permute.xlu0 %687
          %v691 = vmul.f32 %v542, %v686
          %v692 = vmul.f32 %v543, %v688
          %v693 = vsub.f32 1.0, %v691
          %v694 = vsub.f32 1.0, %v692
          %v695 = vmul.f32 %v683, %v683
          %v696 = vmul.f32 %v684, %v684
          %697 = vset.pattern.permute.xlu0 0
          %698 = vperm.xlu0 %697, %v542
          %v699 = vpop.permute.xlu0 %698
          %701 = vset.pattern.permute.xlu0 0
          %702 = vperm.xlu0 %701, %v543
          %v703 = vpop.permute.xlu0 %702
          %v705 = vmul.f32 %v695, %v699
          %v706 = vmul.f32 %v696, %v703
          %v707 = vmul.f32 %v693, %v693
          %v708 = vmul.f32 %v694, %v694
          %v709 = vmul.f32 %v663, %v663
          %v710 = vmul.f32 %v664, %v664
          %712 = vset.pattern.permute.xlu0 1
          %713 = vperm.xlu0 %712, %v707
          %v714 = vpop.permute.xlu0 %713
          %717 = vset.pattern.permute.xlu0 1
          %718 = vperm.xlu0 %717, %v708
          %v719 = vpop.permute.xlu0 %718
          %v721 = vmul.f32 %v714, %v709
          %v722 = vmul.f32 %v719, %v710
          %v723 = vadd.f32 %v705, %v721
          %v724 = vadd.f32 %v706, %v722
          %726 = vset.pattern.permute.xlu0 1
          %727 = vperm.xlu0 %726, %v693
          %v728 = vpop.permute.xlu0 %727
          %731 = vset.pattern.permute.xlu0 1
          %732 = vperm.xlu0 %731, %v694
          %v733 = vpop.permute.xlu0 %732
          %v735 = vmul.f32 %v683, %v728
          %v736 = vmul.f32 %v684, %v733
          %v737 = vmul.f32 %v735, 2.0
          %v738 = vmul.f32 %v736, 2.0
          %v739 = vmul.f32 %v663, %v623
          %v740 = vmul.f32 %v664, %v628
          %v741 = vmul.f32 %v737, %v739
          %v742 = vmul.f32 %v738, %v740
          %v743 = vsub.f32 %v723, %v741
          %v744 = vsub.f32 %v724, %v742
          %v745 = vmax.f32 %v743, 0.0
          %v746 = vmax.f32 %v744, 0.0
          %v747 = vrsqrt.pop %v745
          %v748 = vmul.f32 %v745, %v747
          %vm749 = vcmp.eq.f32.partialorder %v745, inf
          %v750 = vsel %vm749, %v745, %v748
          %vm751 = vcmp.eq.f32.partialorder %v745, 0.0
          %v752 = vand.u32 %v745, 2147483648
          %v753 = vsel %vm751, %v752, %v750
          %v754 = vrsqrt.pop %v746
          %v755 = vmul.f32 %v746, %v754
          %vm756 = vcmp.eq.f32.partialorder %v746, inf
          %v757 = vsel %vm756, %v746, %v755
          %vm758 = vcmp.eq.f32.partialorder %v746, 0.0
          %v759 = vand.u32 %v746, 2147483648
          %v760 = vsel %vm758, %v759, %v757
          %v761 = vmul.f32 %v673, %v673
          %v762 = vmul.f32 %v674, %v674
          %v763 = vmul.f32 %v761, %v699
          %v764 = vmul.f32 %v762, %v703
          %v765 = vadd.f32 %v679, %v763
          %v766 = vadd.f32 %v680, %v764
          %v767 = vmax.f32 %v765, 1e-15
          %v768 = vmax.f32 %v766, 1e-15
          %v769 = vrcp.pop %v767
          %v770 = vrcp.pop %v768
          %v771 = vmul.f32 %v753, %v769
          %v772 = vmul.f32 %v760, %v770
          %v773 = vmul.f32 %v634, %v771
          %v774 = vmul.f32 %v639, %v772
          %v775 = vmax.f32 %v773, -0.99999
          %v776 = vmax.f32 %v774, -0.99999
          %v777 = vmin.f32 %v775, 0.99999
          %v778 = vmin.f32 %v776, 0.99999
          %v779 = vadd.f32 %v777, 1.0
          %v780 = vadd.f32 %v778, 1.0
          %v781 = vsub.f32 1.0, %v777
          %v782 = vsub.f32 1.0, %v778
          %v783 = vrcp.pop %v781
          %v784 = vmul.f32 %v779, %v783
          %v785 = vrcp.pop %v782
          %v786 = vmul.f32 %v780, %v785
          %v787 = vlog2.pop %v784
          %v788 = vmul.f32 %v787, 0.6931472
          %v789 = vlog2.pop %v786
          %v790 = vmul.f32 %v789, 0.6931472
          %v791 = vmul.f32 %v788, 0.5
          %v792 = vmul.f32 %v790, 0.5
          %v793 = vmul.f32 %v791, %v791
          %v794 = vmul.f32 %v792, %v792
          %795 = vset.pattern.permute.xlu0 4
          %796 = vperm.xlu0 %795, %v542
          %v797 = vpop.permute.xlu0 %796
          %799 = vset.pattern.permute.xlu0 4
          %800 = vperm.xlu0 %799, %v543
          %v801 = vpop.permute.xlu0 %800
          %v803 = vmul.f32 %v797, %v793
          %v804 = vmul.f32 %v801, %v794
          // Predicated region
          $region107: #{tpu_custom_call.1} parent=105 // pred_check
            %p805 = pneg %p432
          $region108: #{tpu_custom_call.1} parent=105 // pred_check_branch
            %807 = sbr.rel (%p805) target = $region110
          $region109: #{tpu_custom_call.1} parent=105 // pred_region
            %v808 = vld [vmem:[%s417] sm:$0xff]
            %v809 = vld [vmem:[%s417 + $0x8] sm:$0xff]
            %v810 = vadd.f32 %v808, %v803
            %v811 = vadd.f32 %v809, %v804
            %812 = vst [vmem:[%s417] sm:$0xff] %v810
            %813 = vst [vmem:[%s417 + $0x8] sm:$0xff] %v811
          $region110: #{tpu_custom_call.1} parent=105 // pred_fallthru
            _
          %p814 = scmp.eq.s32.totalorder %s431, 0
          // Predicated region
          $region111: #{tpu_custom_call.1} parent=105 // pred_check
            %p815 = pneg %p814
          $region112: #{tpu_custom_call.1} parent=105 // pred_check_branch
            %817 = sbr.rel (%p815) target = $region114
          $region113: #{tpu_custom_call.1} parent=105 // pred_region
            %818 = vst [vmem:[%s417] sm:$0xff] %v803
            %819 = vst [vmem:[%s417 + $0x8] sm:$0xff] %v804
          $region114: #{tpu_custom_call.1} parent=105 // pred_fallthru
            _
        $region106: #{tpu_custom_call.1} parent=77 // pred_fallthru
          _
        %s820 = sand.u32 %s207, 1
        %s821 = scalar_lea.sflag [#allocation6], %s820
        %s822 = sand.u32 %s207, 1
        %s823 = smul.addr %s822, 16
        %s824 = scalar_lea.vmem [#allocation11], %s823
        // Predicated region
        $region115: #{tpu_custom_call.1} parent=77 // pred_check
          %p825 = pneg %p217
        $region116: #{tpu_custom_call.1} parent=77 // pred_check_branch
          %827 = sbr.rel (%p825) target = $region118
        $region117: #{tpu_custom_call.1} parent=77 // pred_region
          %s828 = smul.u32 2, %s34
          %s830 = ssub.s32 256, 256
          %831 = vsyncadd %s821, %s830
          %s832 = smul.addr %s828, 2
          %s833 = sadd.s32 %s33, %s832
          %s834 = smul.addr %s833, 128
          %s835 = scalar_lea.hbm %s7, %s834
          %s836 = sshll.u32 %s824, 4
          %s837 = int_to_ptr.vmem [resolvable:$true] %s836
          %842 = dma.vmem_to_hbm [thread:$0]  %s837, 256, %s835, %s821, 128, 256, 8
        $region118: #{tpu_custom_call.1} parent=77 // pred_fallthru
          _
      $region78: #{tpu_custom_call.1} parent=5 // pred_fallthru
        _
      %p843 = scmp.le.s32.totalorder 2, %s24
      // Predicated region
      $region119: #{tpu_custom_call.1} parent=5 // pred_check
        %p844 = pneg %p843
      $region120: #{tpu_custom_call.1} parent=5 // pred_check_branch
        %846 = sbr.rel (%p844) target = $region122
      $region121: #{tpu_custom_call.1} parent=5 // pred_region
        %s847 = ssub.s32 %s24, 2
        // Predicated region
        $region123: #{tpu_custom_call.1} parent=121 // pred_check
          %p848 = pneg %p223
        $region124: #{tpu_custom_call.1} parent=121 // pred_check_branch
          %850 = sbr.rel (%p848) target = $region126
        $region125: #{tpu_custom_call.1} parent=121 // pred_region
          %s851 = sand.u32 %s208, 1
          %s852 = scalar_lea.sflag [#allocation6], %s851
          %s853 = sand.u32 %s208, 1
          %s854 = smul.addr %s853, 16
          %s855 = scalar_lea.vmem [#allocation11], %s854
          %856 = dma.done %s852, 256
        $region126: #{tpu_custom_call.1} parent=121 // pred_fallthru
          _
      $region122: #{tpu_custom_call.1} parent=5 // pred_fallthru
        _
    $region6: #{tpu_custom_call.1} parent=1 // loop_footer
      %s28 = sadd.s32 1, %s24
    $region7: #{tpu_custom_call.1} parent=1 // loop_footer_branch
      %23 = sbr.rel target = $region3
    $region8: #{tpu_custom_call.1} parent=1 // loop_exit
      _
    %857 = vsyncpa [#allocation5], 1
    %s858 = scalar_lea.sflag [#allocation5], 1
    %859 = vsyncpa %s858, 1
    %860 = vsyncpa [#allocation8], 1
    %861 = vsyncpa [#allocation6], 1
    %s862 = scalar_lea.sflag [#allocation6], 1
    %863 = vsyncpa %s862, 1

</llo_original>
